<compile_context>
chip_gen: v7x
topology: tpu7x:2x2x1
jax: 0.10.0
libtpu: 0.0.40
codegen_flags: <defaults>
</compile_context>

<pallas_src>
import functools

import jax
import jax.numpy as jnp
from jax.experimental import pallas as pl
from jax.experimental.pallas import tpu as pltpu

LN_EPS = 1e-5  # torch.nn.LayerNorm default


# ----------------------------------------------------------------------------
# Kernels
# ----------------------------------------------------------------------------
def _ln_epilogue(acc_f32, x_ref, b2_ref, g_ref, beta_ref, o_ref):
    """bias + residual + LayerNorm (all in f32), write out in output dtype."""
    y = acc_f32 + b2_ref[...].astype(jnp.float32)
    r = x_ref[...].astype(jnp.float32) + y
    mean = jnp.mean(r, axis=-1, keepdims=True)
    var = jnp.mean((r - mean) ** 2, axis=-1, keepdims=True)
    norm = (r - mean) * jax.lax.rsqrt(var + LN_EPS)
    out = (norm * g_ref[...].astype(jnp.float32)
           + beta_ref[...].astype(jnp.float32))
    o_ref[...] = out.astype(o_ref.dtype)


def _ffn_ln_resident_kernel(x_ref, w1_ref, b1_ref, w2_ref, b2_ref, g_ref,
                            beta_ref, o_ref):
    """Weights VMEM-resident.  grid = (row_tiles,)."""
    x = x_ref[...]                                              # (tn, d_model)
    h = jnp.dot(x, w1_ref[...], preferred_element_type=jnp.float32)
    h = jnp.maximum(h + b1_ref[...].astype(jnp.float32), 0.0)   # (tn, d_ff)
    acc = jnp.dot(h.astype(w2_ref.dtype), w2_ref[...],
                  preferred_element_type=jnp.float32)           # (tn, d_model)
    _ln_epilogue(acc, x_ref, b2_ref, g_ref, beta_ref, o_ref)


def _ffn_ln_streamed_kernel(x_ref, w1_ref, b1_ref, w2_ref, b2_ref, g_ref,
                            beta_ref, o_ref, acc_ref):
    """d_ff streamed as a reduction axis.  grid = (row_tiles, d_ff_tiles)."""
    k = pl.program_id(1)

    @pl.when(k == 0)
    def _():
        acc_ref[...] = jnp.zeros_like(acc_ref)

    x = x_ref[...]                                              # (tn, d_model)
    h = jnp.dot(x, w1_ref[...], preferred_element_type=jnp.float32)
    h = jnp.maximum(h + b1_ref[...].astype(jnp.float32), 0.0)   # (tn, tk)
    acc_ref[...] += jnp.dot(h.astype(w2_ref.dtype), w2_ref[...],
                            preferred_element_type=jnp.float32)

    @pl.when(k == pl.num_programs(1) - 1)
    def _():
        _ln_epilogue(acc_ref[...], x_ref, b2_ref, g_ref, beta_ref, o_ref)


# ----------------------------------------------------------------------------
# Host-side helpers
# ----------------------------------------------------------------------------
def _round_up(x, m):
    return (x + m - 1) // m * m


def _vmem_budget_bytes():
    """~75% of the per-core VMEM capacity (generation-aware, safe fallback)."""
    cap = None
    try:
        info = pltpu.get_tpu_info()
        cap = getattr(info, "vmem_capacity_bytes", None)
    except Exception:  # query unavailable -> be conservative
        cap = None
    if not cap:
        cap = 64 << 20          # smallest per-core VMEM across generations (v7x)
    return int(cap) * 3 // 4    # leave headroom for internal scratch / temporaries


def _pick_tile_k(d_ff_pad, want):
    """Largest multiple of 128 <= want that divides d_ff_pad (>=128 always)."""
    tk = max(128, (min(want, d_ff_pad) // 128) * 128)
    while d_ff_pad % tk != 0:
        tk -= 128
    return tk


# ----------------------------------------------------------------------------
# Public wrapper
# ----------------------------------------------------------------------------
@functools.partial(jax.jit, static_argnames=("m", "tile_n", "tile_k", "mode"))
def ffn_with_private_ln(x, params, m=0, *, tile_n=None, tile_k=512, mode="auto"):
    """x: (batch, seq, d_model).  params: dict (see init_params).  m selects LN."""
    batch, seq, d_model = x.shape
    d_ff = params["w1"].shape[1]
    isz = x.dtype.itemsize
    wsz = jnp.dtype(params["w1"].dtype).itemsize

    # "private" layernorm selection happens at trace time (m is static).
    gamma = params["ln0_g"] if m == 0 else params["ln1_g"]
    beta = params["ln0_b"] if m == 0 else params["ln1_b"]

    # --- pad the hidden dim to a lane multiple.  Padding is mathematically
    #     inert: relu(x@0 + 0) = 0 multiplies zero rows of W2.
    d_ff_pad = _round_up(d_ff, 128)
    w1, b1, w2 = params["w1"], params["b1"], params["w2"]
    if d_ff_pad != d_ff:
        w1 = jnp.pad(w1, ((0, 0), (0, d_ff_pad - d_ff)))
        b1 = jnp.pad(b1, ((0, d_ff_pad - d_ff),))
        w2 = jnp.pad(w2, ((0, d_ff_pad - d_ff), (0, 0)))

    n_rows = batch * seq
    sub = 16 if x.dtype == jnp.bfloat16 else 8   # native sublane packing
    budget = _vmem_budget_bytes()

    # ---- VMEM estimates (double-buffered inputs; f32 temporaries) ----------
    def resident_bytes(tn):
        return (2 * (2 * d_model * d_ff_pad + 8 * d_ff_pad + 3 * 8 * d_model) * wsz
                + 2 * 2 * tn * d_model * isz      # x / out double buffers
                + tn * d_ff_pad * 4               # fc1 intermediate (f32)
                + 6 * tn * d_model * 4)           # epilogue temporaries

    def streamed_bytes(tn, tk):
        return (2 * (2 * d_model * tk + 8 * tk + 3 * 8 * d_model) * wsz
                + 2 * 2 * tn * d_model * isz
                + tn * d_model * 4                # accumulator scratch
                + tn * tk * 4                     # fc1 intermediate (f32)
                + 6 * tn * d_model * 4)

    # ---- row-tile targets ---------------------------------------------------
    if tile_n is None:
        tn_resident_target = 512
        # Streamed path re-fetches weights per row tile: bigger tile -> higher
        # arithmetic intensity (knee ~680 bf16 on v6e, ~310 on v7x).
        tn_streamed_target = 1024 if wsz <= 2 else 768
    else:
        tn_resident_target = tn_streamed_target = tile_n

    def _balance_rows(target):
        """Balanced row tiling: num_tiles x tn covering n_rows, tn % sub == 0."""
        target = max(sub, target)
        num = max(1, -(-n_rows // target))
        t = _round_up(-(-n_rows // num), sub)
        return num, t

    tk = _pick_tile_k(d_ff_pad, tile_k)
    num_tiles_res, tn_res = _balance_rows(tn_resident_target)

    if mode == "resident":
        use_resident = True
    elif mode == "streamed":
        use_resident = False
    else:  # auto: weights resident whenever they (plus tiles) fit in VMEM
        use_resident = resident_bytes(tn_res) <= budget

    if use_resident:
        num_tiles, tn = num_tiles_res, tn_res
    else:
        target = tn_streamed_target
        num_tiles, tn = _balance_rows(target)
        while streamed_bytes(tn, tk) > budget and target > sub:
            target = max(sub, target // 2)
            num_tiles, tn = _balance_rows(target)

    n_pad = num_tiles * tn

    # ---- host-side data prep ------------------------------------------------
    x2d = x.reshape(n_rows, d_model)
    if n_pad != n_rows:  # padded tail rows see LN of a finite vector; sliced off
        x2d = jnp.pad(x2d, ((0, n_pad - n_rows), (0, 0)))

    b1r = b1.reshape(1, d_ff_pad)
    b2r = params["b2"].reshape(1, d_model)
    gr = gamma.reshape(1, d_model)
    br = beta.reshape(1, d_model)

    flops = 4 * n_pad * d_model * d_ff_pad

    if use_resident:
        est = resident_bytes(tn)
        vmem_limit = int(min(budget, max(2 * est, 32 << 20)))
        cost = pl.CostEstimate(
            flops=flops,
            transcendentals=n_pad,
            bytes_accessed=int(2 * n_pad * d_model * isz
                               + 2 * d_model * d_ff_pad * wsz
                               + (d_ff_pad + 3 * d_model) * wsz))
        out2d = pl.pallas_call(
            _ffn_ln_resident_kernel,
            out_shape=jax.ShapeDtypeStruct((n_pad, d_model), x.dtype),
            grid_spec=pltpu.PrefetchScalarGridSpec(
                num_scalar_prefetch=0,
                grid=(num_tiles,),
                in_specs=[
                    pl.BlockSpec((tn, d_model), lambda i: (i, 0)),        # x rows
                    pl.BlockSpec((d_model, d_ff_pad), lambda i: (0, 0)),  # W1 resident
                    pl.BlockSpec((1, d_ff_pad), lambda i: (0, 0)),        # b1 resident
                    pl.BlockSpec((d_ff_pad, d_model), lambda i: (0, 0)),  # W2 resident
                    pl.BlockSpec((1, d_model), lambda i: (0, 0)),         # b2
                    pl.BlockSpec((1, d_model), lambda i: (0, 0)),         # gamma
                    pl.BlockSpec((1, d_model), lambda i: (0, 0)),         # beta
                ],
                out_specs=pl.BlockSpec((tn, d_model), lambda i: (i, 0)),
            ),
            compiler_params=pltpu.CompilerParams(
                dimension_semantics=("parallel",),
                vmem_limit_bytes=vmem_limit,
            ),
            cost_estimate=cost,
        )(x2d, w1, b1r, w2, b2r, gr, br)
    else:
        est = streamed_bytes(tn, tk)
        vmem_limit = int(min(budget, max(2 * est, 32 << 20)))
        cost = pl.CostEstimate(
            flops=flops,
            transcendentals=n_pad,
            bytes_accessed=int(2 * n_pad * d_model * isz
                               + num_tiles * 2 * d_model * d_ff_pad * wsz
                               + (d_ff_pad + 3 * d_model) * wsz))
        out2d = pl.pallas_call(
            _ffn_ln_streamed_kernel,
            out_shape=jax.ShapeDtypeStruct((n_pad, d_model), x.dtype),
            grid_spec=pltpu.PrefetchScalarGridSpec(
                num_scalar_prefetch=0,
                grid=(num_tiles, d_ff_pad // tk),
                in_specs=[
                    pl.BlockSpec((tn, d_model), lambda i, k: (i, 0)),   # x rows
                    pl.BlockSpec((d_model, tk), lambda i, k: (0, k)),   # W1 col block
                    pl.BlockSpec((1, tk), lambda i, k: (0, k)),         # b1 block
                    pl.BlockSpec((tk, d_model), lambda i, k: (k, 0)),   # W2 row block
                    pl.BlockSpec((1, d_model), lambda i, k: (0, 0)),    # b2
                    pl.BlockSpec((1, d_model), lambda i, k: (0, 0)),    # gamma
                    pl.BlockSpec((1, d_model), lambda i, k: (0, 0)),    # beta
                ],
                out_specs=pl.BlockSpec((tn, d_model), lambda i, k: (i, 0)),
                scratch_shapes=[pltpu.VMEM((tn, d_model), jnp.float32)],
            ),
            compiler_params=pltpu.CompilerParams(
                dimension_semantics=("parallel", "arbitrary"),
                vmem_limit_bytes=vmem_limit,
            ),
            cost_estimate=cost,
        )(x2d, w1, b1r, w2, b2r, gr, br)

    return out2d[:n_rows].reshape(batch, seq, d_model)


# ----------------------------------------------------------------------------
# Parameter init + pure-JAX reference
# ----------------------------------------------------------------------------
def init_params(key, d_model, d_ff, dtype=jnp.float32):
    """Deterministic init mirroring nn.Linear / nn.LayerNorm parameter shapes.

    For best TPU performance store w1/w2 (and activations) in bfloat16.
    """
    k1, k2, k3, k4 = jax.random.split(key, 4)
    lim1 = 1.0 / jnp.sqrt(d_model)
    lim2 = 1.0 / jnp.sqrt(d_ff)
    return {
        # stored already transposed for x @ w  (torch Linear weight is (out,in))
        "w1": jax.random.uniform(k1, (d_model, d_ff), dtype, -lim1, lim1),
        "b1": jax.random.uniform(k2, (d_ff,), dtype, -lim1, lim1),
        "w2": jax.random.uniform(k3, (d_ff, d_model), dtype, -lim2, lim2),
        "b2": jax.random.uniform(k4, (d_model,), dtype, -lim2, lim2),
        "ln0_g": jnp.ones((d_model,), dtype),
        "ln0_b": jnp.zeros((d_model,), dtype),
        "ln1_g": jnp.ones((d_model,), dtype),
        "ln1_b": jnp.zeros((d_model,), dtype),
    }


def _reference(x, params, m=0):
    """Pure-JAX reference (f32, highest-precision matmuls)."""
    hi = jax.lax.Precision.HIGHEST
    h = jnp.maximum(jnp.dot(x, params["w1"], precision=hi) + params["b1"], 0.0)
    y = jnp.dot(h, params["w2"], precision=hi) + params["b2"]
    r = x + y
    mean = jnp.mean(r, axis=-1, keepdims=True)
    var = jnp.mean((r - mean) ** 2, axis=-1, keepdims=True)
    norm = (r - mean) / jnp.sqrt(var + LN_EPS)
    if m == 0:
        return norm * params["ln0_g"] + params["ln0_b"]
    return norm * params["ln1_g"] + params["ln1_b"]


if __name__ == "__main__":
    key = jax.random.PRNGKey(0)
    kx, kp, kx2, kp2 = jax.random.split(key, 4)

    # --- Case A: f32, resident-weight path, both private LayerNorms ---------
    batch, seq, d_model, d_ff = 2, 8, 128, 256
    x = jax.random.normal(kx, (batch, seq, d_model), jnp.float32)
    params = init_params(kp, d_model, d_ff, jnp.float32)

    out0 = ffn_with_private_ln(x, params, m=0)
    out1 = ffn_with_private_ln(x, params, m=1)
    ref0 = _reference(x, params, m=0)
    ref1 = _reference(x, params, m=1)
    assert jnp.allclose(out0, ref0, atol=1e-4, rtol=1e-4)
    assert jnp.allclose(out1, ref1, atol=1e-4, rtol=1e-4)

    # --- Case B: same weights, force the d_ff-streaming (k-reduction) path --
    out_s = ffn_with_private_ln(x, params, m=0, mode="streamed", tile_k=128)
    assert jnp.allclose(out_s, ref0, atol=1e-4, rtol=1e-4)

    # --- Case C: ragged rows + d_ff not a lane multiple (exercises padding) -
    batch2, seq2, d_model2, d_ff2 = 2, 9, 128, 192
    x2 = jax.random.normal(kx2, (batch2, seq2, d_model2), jnp.float32)
    params2 = init_params(kp2, d_model2, d_ff2, jnp.float32)
    out2 = ffn_with_private_ln(x2, params2, m=1)
    ref2 = _reference(x2, params2, m=1)
    assert jnp.allclose(out2, ref2, atol=1e-4, rtol=1e-4)

    # --- Case D: bf16 activations + weights (native bf16 MXU path) ----------
    xb = x.astype(jnp.bfloat16)
    params_b = {k: v.astype(jnp.bfloat16) for k, v in params.items()}
    out_b = ffn_with_private_ln(xb, params_b, m=0)
    ref_b = _reference(xb.astype(jnp.float32),
                       {k: v.astype(jnp.float32) for k, v in params_b.items()},
                       m=0)
    # bf16 operands (expected MXU path) -> loose tolerance vs f32 reference.
    assert jnp.allclose(out_b.astype(jnp.float32), ref_b, atol=1e-1, rtol=1e-1)

    jax.block_until_ready((out0, out1, out_s, out2, out_b))
    print("KERNEL_OK")
</pallas_src>

<mosaic_0001>
module attributes {stable_mosaic.version = 11 : i64} {
  func.func @_ffn_ln_resident_kernel(%arg0: i32, %arg1: memref<16x128xf32, #tpu.memory_space<vmem>>, %arg2: memref<128x256xf32, #tpu.memory_space<vmem>>, %arg3: memref<1x256xf32, #tpu.memory_space<vmem>>, %arg4: memref<256x128xf32, #tpu.memory_space<vmem>>, %arg5: memref<1x128xf32, #tpu.memory_space<vmem>>, %arg6: memref<1x128xf32, #tpu.memory_space<vmem>>, %arg7: memref<1x128xf32, #tpu.memory_space<vmem>>, %arg8: memref<16x128xf32, #tpu.memory_space<vmem>>) attributes {dimension_semantics = [#tpu.dimension_semantics<parallel>], iteration_bounds = array<i64: 1>, scalar_prefetch = 0 : i64, scratch_operands = 0 : i64, tpu.core_type = #tpu.core_type<tc>, window_params = [{transform_indices = @transform_0, window_bounds = array<i64: 16, 128>}, {pipeline_mode = #tpu.pipeline_mode<synchronous>, transform_indices = @transform_1, window_bounds = array<i64: 128, 256>}, {pipeline_mode = #tpu.pipeline_mode<synchronous>, transform_indices = @transform_2, window_bounds = array<i64: 1, 256>}, {pipeline_mode = #tpu.pipeline_mode<synchronous>, transform_indices = @transform_3, window_bounds = array<i64: 256, 128>}, {pipeline_mode = #tpu.pipeline_mode<synchronous>, transform_indices = @transform_4, window_bounds = array<i64: 1, 128>}, {pipeline_mode = #tpu.pipeline_mode<synchronous>, transform_indices = @transform_5, window_bounds = array<i64: 1, 128>}, {pipeline_mode = #tpu.pipeline_mode<synchronous>, transform_indices = @transform_6, window_bounds = array<i64: 1, 128>}, {transform_indices = @transform_7, window_bounds = array<i64: 16, 128>}]} {
    %c0 = arith.constant 0 : index
    %c0_0 = arith.constant 0 : index
    %0 = vector.load %arg1[%c0, %c0_0] : memref<16x128xf32, #tpu.memory_space<vmem>>, vector<16x128xf32>
    %c0_1 = arith.constant 0 : index
    %c0_2 = arith.constant 0 : index
    %1 = vector.load %arg2[%c0_1, %c0_2] : memref<128x256xf32, #tpu.memory_space<vmem>>, vector<128x256xf32>
    %cst = arith.constant dense<0.000000e+00> : vector<16x256xf32>
    %2 = tpu.matmul %0, %1, %cst {dimension_numbers = #tpu.dot_dimension_numbers<[1], [0], [0], [1], [0, 0, 1, 1], [], []>} : vector<16x128xf32>, vector<128x256xf32>, vector<16x256xf32> -> vector<16x256xf32>
    %c0_3 = arith.constant 0 : index
    %c0_4 = arith.constant 0 : index
    %3 = vector.load %arg3[%c0_3, %c0_4] : memref<1x256xf32, #tpu.memory_space<vmem>>, vector<1x256xf32>
    %4 = vector.broadcast %3 : vector<1x256xf32> to vector<16x256xf32>
    %5 = arith.addf %2, %4 : vector<16x256xf32>
    %cst_5 = arith.constant 0.000000e+00 : f32
    %6 = vector.broadcast %cst_5 : f32 to vector<16x256xf32>
    %7 = arith.maximumf %5, %6 : vector<16x256xf32>
    %c0_6 = arith.constant 0 : index
    %c0_7 = arith.constant 0 : index
    %8 = vector.load %arg4[%c0_6, %c0_7] : memref<256x128xf32, #tpu.memory_space<vmem>>, vector<256x128xf32>
    %cst_8 = arith.constant dense<0.000000e+00> : vector<16x128xf32>
    %9 = tpu.matmul %7, %8, %cst_8 {dimension_numbers = #tpu.dot_dimension_numbers<[1], [0], [0], [1], [0, 0, 1, 1], [], []>} : vector<16x256xf32>, vector<256x128xf32>, vector<16x128xf32> -> vector<16x128xf32>
    %c0_9 = arith.constant 0 : index
    %c0_10 = arith.constant 0 : index
    %10 = vector.load %arg5[%c0_9, %c0_10] : memref<1x128xf32, #tpu.memory_space<vmem>>, vector<1x128xf32>
    %11 = vector.broadcast %10 : vector<1x128xf32> to vector<16x128xf32>
    %12 = arith.addf %9, %11 : vector<16x128xf32>
    %c0_11 = arith.constant 0 : index
    %c0_12 = arith.constant 0 : index
    %13 = vector.load %arg1[%c0_11, %c0_12] : memref<16x128xf32, #tpu.memory_space<vmem>>, vector<16x128xf32>
    %14 = arith.addf %13, %12 : vector<16x128xf32>
    %cst_13 = arith.constant dense<0.000000e+00> : vector<16xf32>
    %15 = vector.multi_reduction <add>, %14, %cst_13 [1] : vector<16x128xf32> to vector<16xf32>
    %16 = vector.shape_cast %15 : vector<16xf32> to vector<16x1xf32>
    %cst_14 = arith.constant 1.280000e+02 : f32
    %17 = vector.broadcast %cst_14 : f32 to vector<16x1xf32>
    %18 = arith.divf %16, %17 : vector<16x1xf32>
    %19 = vector.broadcast %18 : vector<16x1xf32> to vector<16x128xf32>
    %20 = arith.subf %14, %19 : vector<16x128xf32>
    %21 = arith.mulf %20, %20 : vector<16x128xf32>
    %cst_15 = arith.constant dense<0.000000e+00> : vector<16xf32>
    %22 = vector.multi_reduction <add>, %21, %cst_15 [1] : vector<16x128xf32> to vector<16xf32>
    %23 = vector.shape_cast %22 : vector<16xf32> to vector<16x1xf32>
    %cst_16 = arith.constant 1.280000e+02 : f32
    %24 = vector.broadcast %cst_16 : f32 to vector<16x1xf32>
    %25 = arith.divf %23, %24 : vector<16x1xf32>
    %26 = vector.broadcast %18 : vector<16x1xf32> to vector<16x128xf32>
    %27 = arith.subf %14, %26 : vector<16x128xf32>
    %cst_17 = arith.constant 9.99999974E-6 : f32
    %28 = vector.broadcast %cst_17 : f32 to vector<16x1xf32>
    %29 = arith.addf %25, %28 : vector<16x1xf32>
    %30 = math.rsqrt %29 : vector<16x1xf32>
    %31 = vector.broadcast %30 : vector<16x1xf32> to vector<16x128xf32>
    %32 = arith.mulf %27, %31 : vector<16x128xf32>
    %c0_18 = arith.constant 0 : index
    %c0_19 = arith.constant 0 : index
    %33 = vector.load %arg6[%c0_18, %c0_19] : memref<1x128xf32, #tpu.memory_space<vmem>>, vector<1x128xf32>
    %34 = vector.broadcast %33 : vector<1x128xf32> to vector<16x128xf32>
    %35 = arith.mulf %32, %34 : vector<16x128xf32>
    %c0_20 = arith.constant 0 : index
    %c0_21 = arith.constant 0 : index
    %36 = vector.load %arg7[%c0_20, %c0_21] : memref<1x128xf32, #tpu.memory_space<vmem>>, vector<1x128xf32>
    %37 = vector.broadcast %36 : vector<1x128xf32> to vector<16x128xf32>
    %38 = arith.addf %35, %37 : vector<16x128xf32>
    %c0_22 = arith.constant 0 : index
    %c0_23 = arith.constant 0 : index
    %39 = vector.load %arg8[%c0_22, %c0_23] : memref<16x128xf32, #tpu.memory_space<vmem>>, vector<16x128xf32>
    tpu.vector_store %arg8[%c0_22, %c0_23], %38 {strides = array<i32>} : memref<16x128xf32, #tpu.memory_space<vmem>>, vector<16x128xf32>,
    return
  }
  func.func @transform_0(%arg0: i32) -> (i32, i32) {
    %c0_i32 = arith.constant 0 : i32
    %c0_i32_0 = arith.constant 0 : i32
    return %arg0, %c0_i32 : i32, i32
  }
  func.func @transform_1(%arg0: i32) -> (i32, i32) {
    %c0_i32 = arith.constant 0 : i32
    %c0_i32_0 = arith.constant 0 : i32
    %c0_i32_1 = arith.constant 0 : i32
    return %c0_i32, %c0_i32_0 : i32, i32
  }
  func.func @transform_2(%arg0: i32) -> (i32, i32) {
    %c0_i32 = arith.constant 0 : i32
    %c0_i32_0 = arith.constant 0 : i32
    %c0_i32_1 = arith.constant 0 : i32
    return %c0_i32, %c0_i32_0 : i32, i32
  }
  func.func @transform_3(%arg0: i32) -> (i32, i32) {
    %c0_i32 = arith.constant 0 : i32
    %c0_i32_0 = arith.constant 0 : i32
    %c0_i32_1 = arith.constant 0 : i32
    return %c0_i32, %c0_i32_0 : i32, i32
  }
  func.func @transform_4(%arg0: i32) -> (i32, i32) {
    %c0_i32 = arith.constant 0 : i32
    %c0_i32_0 = arith.constant 0 : i32
    %c0_i32_1 = arith.constant 0 : i32
    return %c0_i32, %c0_i32_0 : i32, i32
  }
  func.func @transform_5(%arg0: i32) -> (i32, i32) {
    %c0_i32 = arith.constant 0 : i32
    %c0_i32_0 = arith.constant 0 : i32
    %c0_i32_1 = arith.constant 0 : i32
    return %c0_i32, %c0_i32_0 : i32, i32
  }
  func.func @transform_6(%arg0: i32) -> (i32, i32) {
    %c0_i32 = arith.constant 0 : i32
    %c0_i32_0 = arith.constant 0 : i32
    %c0_i32_1 = arith.constant 0 : i32
    return %c0_i32, %c0_i32_0 : i32, i32
  }
  func.func @transform_7(%arg0: i32) -> (i32, i32) {
    %c0_i32 = arith.constant 0 : i32
    %c0_i32_0 = arith.constant 0 : i32
    return %arg0, %c0_i32 : i32, i32
  }
}

</mosaic_0001>

<llo_original>
// kernel: ffn_with_private_ln.1
$region0: #{ffn_with_private_ln.1}
  #allocation0 [shape = 'u32[]', space=smem, size = 0x4, offset = 0x4, fixed_abs, tag = 'smem constant byte address 0x4 - core index']
  #allocation1 [shape = 'u32[144,128]{1,0:T(1,128)}', space=vmem, size = 0x12000, scoped, tag = 'internal scratch']
  %s0 = inlined_call_operand.vmem [shape: f32[16,128], index: 0, kind: input, shape index: {}]
  %s1 = inlined_call_operand.hbm [shape: f32[128,256], index: 1, kind: input, shape index: {}]
  %s2 = inlined_call_operand.vmem [shape: f32[1,256], index: 2, kind: input, shape index: {}]
  %s3 = inlined_call_operand.hbm [shape: f32[256,128], index: 3, kind: input, shape index: {}]
  %s4 = inlined_call_operand.vmem [shape: f32[1,128], index: 4, kind: input, shape index: {}]
  %s5 = inlined_call_operand.vmem [shape: f32[1,128], index: 5, kind: input, shape index: {}]
  %s6 = inlined_call_operand.vmem [shape: f32[1,128], index: 6, kind: input, shape index: {}]
  %s7 = inlined_call_operand.hbm [shape: f32[16,128], index: 7, kind: output, shape index: {}]
  %s8 = sld [smem:[#allocation0]]
  $region46: #{ffn_with_private_ln.1} parent=0
    _
  %s10 = ssub.s32 1, %s8
  %s11 = scalar_select 0, %s10, %s8
  $region1: #{ffn_with_private_ln.1} parent=0
    #allocation2 [shape = 'u8[131072]{0}', space=vmem, size = 0x20000, scoped, tag = 'input window, operand 1, single buffered']
    #allocation3 [shape = 's32[1]{0}', space=sflag, size = 0x4, scoped, tag = 'scoped memory for ffn_with_private_ln.1']
    #allocation4 [shape = 's32[1]{0}', space=sflag, size = 0x4, scoped, tag = 'scoped memory for ffn_with_private_ln.1']
    #allocation5 [shape = 'u8[131072]{0}', space=vmem, size = 0x20000, scoped, tag = 'input window, operand 3, single buffered']
    #allocation6 [shape = 's32[1]{0}', space=sflag, size = 0x4, scoped, tag = 'scoped memory for ffn_with_private_ln.1']
    #allocation7 [shape = 'u8[8192]{0}', space=vmem, size = 0x2000, scoped, tag = 'output window, operand 0, single buffered']
    %12 = vsyncpa [#allocation3], 0
    %13 = vsyncpa [#allocation6], 0
    %14 = vsyncpa [#allocation4], 0
    // Predicated region
    $region2: #{ffn_with_private_ln.1} parent=1 // pred_check
      _
    $region3: #{ffn_with_private_ln.1} parent=1 // pred_check_branch
      %16 = sbr.rel (0) target = $region5
    $region4: #{ffn_with_private_ln.1} parent=1 // pred_region
      _
    $region5: #{ffn_with_private_ln.1} parent=1 // pred_fallthru
      _
    // Predicated region
    $region6: #{ffn_with_private_ln.1} parent=1 // pred_check
      _
    $region7: #{ffn_with_private_ln.1} parent=1 // pred_check_branch
      %18 = sbr.rel (0) target = $region9
    $region8: #{ffn_with_private_ln.1} parent=1 // pred_region
      %s20 = ssub.s32 4096, 4096
      %21 = vsyncadd [#allocation3], %s20
      %s22 = sshll.u32 [#allocation2], 4
      %s23 = int_to_ptr.vmem [resolvable:$true] %s22
      %28 = dma.hbm_to_vmem [thread:$0]  %s1, 4096, %s23, [#allocation3], 256, 256, 16
    $region9: #{ffn_with_private_ln.1} parent=1 // pred_fallthru
      _
    // Predicated region
    $region10: #{ffn_with_private_ln.1} parent=1 // pred_check
      _
    $region11: #{ffn_with_private_ln.1} parent=1 // pred_check_branch
      %30 = sbr.rel (0) target = $region13
    $region12: #{ffn_with_private_ln.1} parent=1 // pred_region
      _
    $region13: #{ffn_with_private_ln.1} parent=1 // pred_fallthru
      _
    // Predicated region
    $region14: #{ffn_with_private_ln.1} parent=1 // pred_check
      _
    $region15: #{ffn_with_private_ln.1} parent=1 // pred_check_branch
      %32 = sbr.rel (0) target = $region17
    $region16: #{ffn_with_private_ln.1} parent=1 // pred_region
      %s34 = ssub.s32 4096, 4096
      %35 = vsyncadd [#allocation6], %s34
      %s36 = sshll.u32 [#allocation5], 4
      %s37 = int_to_ptr.vmem [resolvable:$true] %s36
      %42 = dma.hbm_to_vmem [thread:$0]  %s3, 4096, %s37, [#allocation6], 128, 128, 8
    $region17: #{ffn_with_private_ln.1} parent=1 // pred_fallthru
      _
    // Predicated region
    $region18: #{ffn_with_private_ln.1} parent=1 // pred_check
      _
    $region19: #{ffn_with_private_ln.1} parent=1 // pred_check_branch
      %44 = sbr.rel (0) target = $region21
    $region20: #{ffn_with_private_ln.1} parent=1 // pred_region
      _
    $region21: #{ffn_with_private_ln.1} parent=1 // pred_fallthru
      _
    // Predicated region
    $region22: #{ffn_with_private_ln.1} parent=1 // pred_check
      _
    $region23: #{ffn_with_private_ln.1} parent=1 // pred_check_branch
      %46 = sbr.rel (0) target = $region25
    $region24: #{ffn_with_private_ln.1} parent=1 // pred_region
      _
    $region25: #{ffn_with_private_ln.1} parent=1 // pred_fallthru
      _
    // Predicated region
    $region26: #{ffn_with_private_ln.1} parent=1 // pred_check
      _
    $region27: #{ffn_with_private_ln.1} parent=1 // pred_check_branch
      %48 = sbr.rel (0) target = $region29
    $region28: #{ffn_with_private_ln.1} parent=1 // pred_region
      _
    $region29: #{ffn_with_private_ln.1} parent=1 // pred_fallthru
      _
    // Predicated region
    $region30: #{ffn_with_private_ln.1} parent=1 // pred_check
      _
    $region31: #{ffn_with_private_ln.1} parent=1 // pred_check_branch
      %50 = sbr.rel (0) target = $region33
    $region32: #{ffn_with_private_ln.1} parent=1 // pred_region
      %51 = dma.done [#allocation3], 4096
    $region33: #{ffn_with_private_ln.1} parent=1 // pred_fallthru
      _
    // Predicated region
    $region34: #{ffn_with_private_ln.1} parent=1 // pred_check
      _
    $region35: #{ffn_with_private_ln.1} parent=1 // pred_check_branch
      %53 = sbr.rel (0) target = $region37
    $region36: #{ffn_with_private_ln.1} parent=1 // pred_region
      %54 = dma.done [#allocation6], 4096
    $region37: #{ffn_with_private_ln.1} parent=1 // pred_fallthru
      _
    %v55 = vld [vmem:[%s0] sm:$0xff]
    %v56 = vld [vmem:[%s0 + $0x8] sm:$0xff]
    %v57 = vld [vmem:[#allocation2] sm:$0xff]
    %v58 = vld [vmem:[#allocation2 + $0x8] sm:$0xff]
    %v59 = vld [vmem:[#allocation2 + $0x10] sm:$0xff]
    %v60 = vld [vmem:[#allocation2 + $0x18] sm:$0xff]
    %v61 = vld [vmem:[#allocation2 + $0x20] sm:$0xff]
    %v62 = vld [vmem:[#allocation2 + $0x28] sm:$0xff]
    %v63 = vld [vmem:[#allocation2 + $0x30] sm:$0xff]
    %v64 = vld [vmem:[#allocation2 + $0x38] sm:$0xff]
    %v65 = vld [vmem:[#allocation2 + $0x40] sm:$0xff]
    %v66 = vld [vmem:[#allocation2 + $0x48] sm:$0xff]
    %v67 = vld [vmem:[#allocation2 + $0x50] sm:$0xff]
    %v68 = vld [vmem:[#allocation2 + $0x58] sm:$0xff]
    %v69 = vld [vmem:[#allocation2 + $0x60] sm:$0xff]
    %v70 = vld [vmem:[#allocation2 + $0x68] sm:$0xff]
    %v71 = vld [vmem:[#allocation2 + $0x70] sm:$0xff]
    %v72 = vld [vmem:[#allocation2 + $0x78] sm:$0xff]
    %v73 = vld [vmem:[#allocation2 + $0x80] sm:$0xff]
    %v74 = vld [vmem:[#allocation2 + $0x88] sm:$0xff]
    %v75 = vld [vmem:[#allocation2 + $0x90] sm:$0xff]
    %v76 = vld [vmem:[#allocation2 + $0x98] sm:$0xff]
    %v77 = vld [vmem:[#allocation2 + $0xa0] sm:$0xff]
    %v78 = vld [vmem:[#allocation2 + $0xa8] sm:$0xff]
    %v79 = vld [vmem:[#allocation2 + $0xb0] sm:$0xff]
    %v80 = vld [vmem:[#allocation2 + $0xb8] sm:$0xff]
    %v81 = vld [vmem:[#allocation2 + $0xc0] sm:$0xff]
    %v82 = vld [vmem:[#allocation2 + $0xc8] sm:$0xff]
    %v83 = vld [vmem:[#allocation2 + $0xd0] sm:$0xff]
    %v84 = vld [vmem:[#allocation2 + $0xd8] sm:$0xff]
    %v85 = vld [vmem:[#allocation2 + $0xe0] sm:$0xff]
    %v86 = vld [vmem:[#allocation2 + $0xe8] sm:$0xff]
    %v87 = vld [vmem:[#allocation2 + $0xf0] sm:$0xff]
    %v88 = vld [vmem:[#allocation2 + $0xf8] sm:$0xff]
    %v89 = vld [vmem:[%s2] sm:$0x3]
    %v91 = vlaneseq
    %v92 = vshrl.u32 %v91, 7
    %v93 = vsub.s32 0, %v92
    %v94 = vrot.slane %v89, %v93
    %v95 = vlaneseq
    %v96 = vshrl.u32 %v95, 7
    %v97 = vsub.s32 1, %v96
    %v98 = vrot.slane %v89, %v97
    %101 = vmatprep.subr.mxu0 %v58
    %102 = vmatpush1.msra.mxu0 %v57
    %103 = vmatprep.subr.mxu0 %v60
    %104 = vmatpush1.msra.mxu0 %v59
    %105 = vmatprep.subr.mxu0 %v62
    %106 = vmatpush1.msra.mxu0 %v61
    %107 = vmatprep.subr.mxu0 %v64
    %108 = vmatpush1.msra.mxu0 %v63
    %109 = vmatprep.subr.mxu0 %v66
    %110 = vmatpush1.msra.mxu0 %v65
    %111 = vmatprep.subr.mxu0 %v68
    %112 = vmatpush1.msra.mxu0 %v67
    %113 = vmatprep.subr.mxu0 %v70
    %114 = vmatpush1.msra.mxu0 %v69
    %115 = vmatprep.subr.mxu0 %v72
    %116 = vmatpush1.msra.mxu0 %v71
    %117 = vmatprep.subr.mxu0 %v74
    %118 = vmatpush1.msra.mxu0 %v73
    %119 = vmatprep.subr.mxu0 %v76
    %120 = vmatpush1.msra.mxu0 %v75
    %121 = vmatprep.subr.mxu0 %v78
    %122 = vmatpush1.msra.mxu0 %v77
    %123 = vmatprep.subr.mxu0 %v80
    %124 = vmatpush1.msra.mxu0 %v79
    %125 = vmatprep.subr.mxu0 %v82
    %126 = vmatpush1.msra.mxu0 %v81
    %127 = vmatprep.subr.mxu0 %v84
    %128 = vmatpush1.msra.mxu0 %v83
    %129 = vmatprep.subr.mxu0 %v86
    %130 = vmatpush1.msra.mxu0 %v85
    %131 = vmatprep.subr.mxu0 %v88
    %132 = vmatpush1.msra.mxu0 %v87
    %133 = vmatprep.subr.mxu0 0.0
    %134 = vmatpush1.msra.mxu0 0.0
    %135 = vmatprep.subr.mxu0 0.0
    %136 = vmatpush1.msra.mxu0 0.0
    %137 = vmatprep.subr.mxu0 0.0
    %138 = vmatpush1.msra.mxu0 0.0
    %139 = vmatprep.subr.mxu0 0.0
    %140 = vmatpush1.msra.mxu0 0.0
    %141 = vmatprep.subr.mxu0 0.0
    %142 = vmatpush1.msra.mxu0 0.0
    %143 = vmatprep.subr.mxu0 0.0
    %144 = vmatpush1.msra.mxu0 0.0
    %145 = vmatprep.subr.mxu0 0.0
    %146 = vmatpush1.msra.mxu0 0.0
    %147 = vmatprep.subr.mxu0 0.0
    %148 = vmatpush1.msra.mxu0 0.0
    %149 = vmatprep.subr.mxu0 0.0
    %150 = vmatpush1.msra.mxu0 0.0
    %151 = vmatprep.subr.mxu0 0.0
    %152 = vmatpush1.msra.mxu0 0.0
    %153 = vmatprep.subr.mxu0 0.0
    %154 = vmatpush1.msra.mxu0 0.0
    %155 = vmatprep.subr.mxu0 0.0
    %156 = vmatpush1.msra.mxu0 0.0
    %157 = vmatprep.subr.mxu0 0.0
    %158 = vmatpush1.msra.mxu0 0.0
    %159 = vmatprep.subr.mxu0 0.0
    %160 = vmatpush1.msra.mxu0 0.0
    %161 = vmatprep.subr.mxu0 0.0
    %162 = vmatpush1.msra.mxu0 0.0
    %163 = vmatprep.subr.mxu0 0.0
    %164 = vmatpush1.msra.mxu0 0.0
    %165 = vmatprep.mubr.f32.mxu0 0.0
    %166 = vmatmul.mubr.f32.gmra.mrb[0].mxu0 %v55
    %v167 = vpop.f32.mrb[0].mxu0
    %v168 = vadd.f32 %v94, %v167
    %v169 = vpop.f32.mrb[0].mxu0
    %v170 = vadd.f32 %v98, %v169
    %171 = vmatprep.mubr.f32.mxu0 0.0
    %172 = vmatmul.mubr.f32.gmra.mrb[0].mxu0 %v56
    %v173 = vpop.f32.mrb[0].mxu0
    %v174 = vadd.f32 %v94, %v173
    %v175 = vpop.f32.mrb[0].mxu0
    %v176 = vadd.f32 %v98, %v175
    %177 = vdwg.mxu0
    %v178 = vmax.f32 %v168, 0.0
    %v179 = vmax.f32 %v170, 0.0
    %v180 = vmax.f32 %v174, 0.0
    %v181 = vmax.f32 %v176, 0.0
    %v182 = vld [vmem:[#allocation5] sm:$0xff]
    %v183 = vld [vmem:[#allocation5 + $0x8] sm:$0xff]
    %v184 = vld [vmem:[#allocation5 + $0x10] sm:$0xff]
    %v185 = vld [vmem:[#allocation5 + $0x18] sm:$0xff]
    %v186 = vld [vmem:[#allocation5 + $0x20] sm:$0xff]
    %v187 = vld [vmem:[#allocation5 + $0x28] sm:$0xff]
    %v188 = vld [vmem:[#allocation5 + $0x30] sm:$0xff]
    %v189 = vld [vmem:[#allocation5 + $0x38] sm:$0xff]
    %v190 = vld [vmem:[#allocation5 + $0x40] sm:$0xff]
    %v191 = vld [vmem:[#allocation5 + $0x48] sm:$0xff]
    %v192 = vld [vmem:[#allocation5 + $0x50] sm:$0xff]
    %v193 = vld [vmem:[#allocation5 + $0x58] sm:$0xff]
    %v194 = vld [vmem:[#allocation5 + $0x60] sm:$0xff]
    %v195 = vld [vmem:[#allocation5 + $0x68] sm:$0xff]
    %v196 = vld [vmem:[#allocation5 + $0x70] sm:$0xff]
    %v197 = vld [vmem:[#allocation5 + $0x78] sm:$0xff]
    %v198 = vld [vmem:[#allocation5 + $0x80] sm:$0xff]
    %v199 = vld [vmem:[#allocation5 + $0x88] sm:$0xff]
    %v200 = vld [vmem:[#allocation5 + $0x90] sm:$0xff]
    %v201 = vld [vmem:[#allocation5 + $0x98] sm:$0xff]
    %v202 = vld [vmem:[#allocation5 + $0xa0] sm:$0xff]
    %v203 = vld [vmem:[#allocation5 + $0xa8] sm:$0xff]
    %v204 = vld [vmem:[#allocation5 + $0xb0] sm:$0xff]
    %v205 = vld [vmem:[#allocation5 + $0xb8] sm:$0xff]
    %v206 = vld [vmem:[#allocation5 + $0xc0] sm:$0xff]
    %v207 = vld [vmem:[#allocation5 + $0xc8] sm:$0xff]
    %v208 = vld [vmem:[#allocation5 + $0xd0] sm:$0xff]
    %v209 = vld [vmem:[#allocation5 + $0xd8] sm:$0xff]
    %v210 = vld [vmem:[#allocation5 + $0xe0] sm:$0xff]
    %v211 = vld [vmem:[#allocation5 + $0xe8] sm:$0xff]
    %v212 = vld [vmem:[#allocation5 + $0xf0] sm:$0xff]
    %v213 = vld [vmem:[#allocation5 + $0xf8] sm:$0xff]
    %v214 = vld [vmem:[%s4] sm:$0x1]
    %v216 = vlaneseq
    %v217 = vshrl.u32 %v216, 7
    %v218 = vsub.s32 0, %v217
    %v219 = vrot.slane %v214, %v218
    %221 = vmatprep.subr.mxu0 0.0
    %222 = vmatpush1.msra.mxu0 %v182
    %223 = vmatprep.subr.mxu0 0.0
    %224 = vmatpush1.msra.mxu0 %v183
    %225 = vmatprep.subr.mxu0 0.0
    %226 = vmatpush1.msra.mxu0 %v184
    %227 = vmatprep.subr.mxu0 0.0
    %228 = vmatpush1.msra.mxu0 %v185
    %229 = vmatprep.subr.mxu0 0.0
    %230 = vmatpush1.msra.mxu0 %v186
    %231 = vmatprep.subr.mxu0 0.0
    %232 = vmatpush1.msra.mxu0 %v187
    %233 = vmatprep.subr.mxu0 0.0
    %234 = vmatpush1.msra.mxu0 %v188
    %235 = vmatprep.subr.mxu0 0.0
    %236 = vmatpush1.msra.mxu0 %v189
    %237 = vmatprep.subr.mxu0 0.0
    %238 = vmatpush1.msra.mxu0 %v190
    %239 = vmatprep.subr.mxu0 0.0
    %240 = vmatpush1.msra.mxu0 %v191
    %241 = vmatprep.subr.mxu0 0.0
    %242 = vmatpush1.msra.mxu0 %v192
    %243 = vmatprep.subr.mxu0 0.0
    %244 = vmatpush1.msra.mxu0 %v193
    %245 = vmatprep.subr.mxu0 0.0
    %246 = vmatpush1.msra.mxu0 %v194
    %247 = vmatprep.subr.mxu0 0.0
    %248 = vmatpush1.msra.mxu0 %v195
    %249 = vmatprep.subr.mxu0 0.0
    %250 = vmatpush1.msra.mxu0 %v196
    %251 = vmatprep.subr.mxu0 0.0
    %252 = vmatpush1.msra.mxu0 %v197
    %253 = vmatprep.subr.mxu0 0.0
    %254 = vmatpush1.msra.mxu0 %v198
    %255 = vmatprep.subr.mxu0 0.0
    %256 = vmatpush1.msra.mxu0 %v199
    %257 = vmatprep.subr.mxu0 0.0
    %258 = vmatpush1.msra.mxu0 %v200
    %259 = vmatprep.subr.mxu0 0.0
    %260 = vmatpush1.msra.mxu0 %v201
    %261 = vmatprep.subr.mxu0 0.0
    %262 = vmatpush1.msra.mxu0 %v202
    %263 = vmatprep.subr.mxu0 0.0
    %264 = vmatpush1.msra.mxu0 %v203
    %265 = vmatprep.subr.mxu0 0.0
    %266 = vmatpush1.msra.mxu0 %v204
    %267 = vmatprep.subr.mxu0 0.0
    %268 = vmatpush1.msra.mxu0 %v205
    %269 = vmatprep.subr.mxu0 0.0
    %270 = vmatpush1.msra.mxu0 %v206
    %271 = vmatprep.subr.mxu0 0.0
    %272 = vmatpush1.msra.mxu0 %v207
    %273 = vmatprep.subr.mxu0 0.0
    %274 = vmatpush1.msra.mxu0 %v208
    %275 = vmatprep.subr.mxu0 0.0
    %276 = vmatpush1.msra.mxu0 %v209
    %277 = vmatprep.subr.mxu0 0.0
    %278 = vmatpush1.msra.mxu0 %v210
    %279 = vmatprep.subr.mxu0 0.0
    %280 = vmatpush1.msra.mxu0 %v211
    %281 = vmatprep.subr.mxu0 0.0
    %282 = vmatpush1.msra.mxu0 %v212
    %283 = vmatprep.subr.mxu0 0.0
    %284 = vmatpush1.msra.mxu0 %v213
    %285 = vmatprep.mubr.f32.mxu0 %v179
    %286 = vmatmul.mubr.f32.gmra.mrb[0].mxu0 %v178
    %v287 = vpop.f32.mrb[0].mxu0
    %v288 = vadd.f32 %v219, %v287
    %v289 = vpop.f32.mrb[0].mxu0
    %290 = vmatprep.mubr.f32.mxu0 %v181
    %291 = vmatmul.mubr.f32.gmra.mrb[0].mxu0 %v180
    %v292 = vpop.f32.mrb[0].mxu0
    %v293 = vadd.f32 %v219, %v292
    %v294 = vpop.f32.mrb[0].mxu0
    %295 = vdwg.mxu0
    %v296 = vadd.f32 %v55, %v288
    %v297 = vadd.f32 %v56, %v293
    %298 = vadd.xlane.f32.xlu0 %v296
    %v299 = vpop.xlane.xlu0 %298
    %300 = vadd.xlane.f32.xlu0 %v297
    %v301 = vpop.xlane.xlu0 %300
    %v302 = vrcp.pop 128.0
    %v303 = vmul.f32 %v299, %v302
    %v304 = vmul.f32 %v301, %v302
    %v305 = vsub.f32 %v296, %v303
    %v306 = vsub.f32 %v297, %v304
    %v307 = vmul.f32 %v305, %v305
    %v308 = vmul.f32 %v306, %v306
    %309 = vadd.xlane.f32.xlu0 %v307
    %v310 = vpop.xlane.xlu0 %309
    %311 = vadd.xlane.f32.xlu0 %v308
    %v312 = vpop.xlane.xlu0 %311
    %v313 = vmul.f32 %v310, %v302
    %v314 = vmul.f32 %v312, %v302
    %v315 = vadd.f32 %v313, 1e-05
    %v316 = vadd.f32 %v314, 1e-05
    %v317 = vrsqrt.pop %v315
    %v318 = vrsqrt.pop %v316
    %v319 = vmul.f32 %v305, %v317
    %v320 = vmul.f32 %v306, %v318
    %v321 = vld [vmem:[%s5] sm:$0x1]
    %v323 = vlaneseq
    %v324 = vshrl.u32 %v323, 7
    %v325 = vsub.s32 0, %v324
    %v326 = vrot.slane %v321, %v325
    %v328 = vmul.f32 %v319, %v326
    %v329 = vmul.f32 %v320, %v326
    %v330 = vld [vmem:[%s6] sm:$0x1]
    %v332 = vlaneseq
    %v333 = vshrl.u32 %v332, 7
    %v334 = vsub.s32 0, %v333
    %v335 = vrot.slane %v330, %v334
    %v337 = vadd.f32 %v328, %v335
    %v338 = vadd.f32 %v329, %v335
    %339 = vst [vmem:[#allocation7] sm:$0xff] %v337
    %340 = vst [vmem:[#allocation7 + $0x8] sm:$0xff] %v338
    // Predicated region
    $region38: #{ffn_with_private_ln.1} parent=1 // pred_check
      _
    $region39: #{ffn_with_private_ln.1} parent=1 // pred_check_branch
      %342 = sbr.rel (0) target = $region41
    $region40: #{ffn_with_private_ln.1} parent=1 // pred_region
      %s344 = ssub.s32 256, 256
      %345 = vsyncadd [#allocation4], %s344
      %s346 = sshll.u32 [#allocation7], 4
      %s347 = int_to_ptr.vmem [resolvable:$true] %s346
      %352 = dma.vmem_to_hbm [thread:$0]  %s347, 256, %s7, [#allocation4], 128, 128, 8
    $region41: #{ffn_with_private_ln.1} parent=1 // pred_fallthru
      _
    // Predicated region
    $region42: #{ffn_with_private_ln.1} parent=1 // pred_check
      _
    $region43: #{ffn_with_private_ln.1} parent=1 // pred_check_branch
      %354 = sbr.rel (0) target = $region45
    $region44: #{ffn_with_private_ln.1} parent=1 // pred_region
      %355 = dma.done [#allocation4], 256
    $region45: #{ffn_with_private_ln.1} parent=1 // pred_fallthru
      _
    %356 = vsyncpa [#allocation3], 1
    %357 = vsyncpa [#allocation6], 1
    %358 = vsyncpa [#allocation4], 1

</llo_original>
